<compile_context>
chip_gen: v5e
topology: v5e:2x2
jax: 0.10.0
libtpu: 0.0.40
codegen_flags: <defaults>
</compile_context>

<pallas_src>
import math

import jax
import jax.numpy as jnp
from jax import lax
from jax.experimental import pallas as pl
from jax.experimental.pallas import tpu as pltpu


def _round_up(n, m):
    return (n + m - 1) // m * m


def _vmem_limit():
    """Generation-aware scoped-VMEM budget (v7x: 64 MiB/TC, v5e/v6e: 128 MiB)."""
    try:
        cap = getattr(pltpu.get_tpu_info(), "vmem_capacity_bytes", None)
        if cap:
            return int(min(cap * 3 // 4, 100 * 1024 * 1024))
    except Exception:
        pass
    return 32 * 1024 * 1024


def _plan_kn(in_features, out_features):
    """Shared K/N tiling plan used by both the one-shot fold and the hot path."""
    # K tile: prefer a 128-multiple divisor (no x padding needed); otherwise a
    # single full-dim K block; only for huge ragged K do we fall back to
    # padding x's contraction dim with zeros.
    if in_features % 128 == 0:
        tk = max(t for t in (512, 256, 128) if in_features % t == 0)
    elif in_features <= 2048:
        tk = in_features
    else:
        tk = 512
    kp = _round_up(in_features, tk)
    # N tile: 128 when out_features <= 256 so small problems still expose >=2
    # parallel grid steps (v7x has 2 TensorCores); 256 otherwise.
    tn = 128 if out_features <= 256 else 256
    np_ = _round_up(out_features, tn)
    return tk, tn, kp, np_


# ---------------------------------------------------------------------------
# One-shot fold:  masked_w_t = (M * W).T  padded to (kp, np_), in compute dtype
# ---------------------------------------------------------------------------
def _mask_fold_kernel(wt_ref, mt_ref, o_ref):
    o_ref[...] = (wt_ref[...] * mt_ref[...]).astype(o_ref.dtype)


def fold_filter_weight(weight, filter_square_matrix, *, compute_dtype=jnp.bfloat16):
    """Precompute the masked, transposed, tile-padded weight ONCE per update.

    Returns an array of shape (kp, np_) in `compute_dtype` ready for
    filter_linear_apply (K-major, MXU-native orientation).  Use
    compute_dtype=jnp.float32 for strict f32 parity with the PyTorch module.
    """
    out_features, in_features = weight.shape
    assert filter_square_matrix.shape == weight.shape
    tk, tn, kp, np_ = _plan_kn(in_features, out_features)

    # One-shot prep (off the hot path): transpose + zero-pad to the tile grid.
    wt = jnp.pad(jnp.transpose(weight).astype(jnp.float32),
                 ((0, kp - in_features), (0, np_ - out_features)))
    mt = jnp.pad(jnp.transpose(filter_square_matrix).astype(jnp.float32),
                 ((0, kp - in_features), (0, np_ - out_features)))

    return pl.pallas_call(
        _mask_fold_kernel,
        out_shape=jax.ShapeDtypeStruct((kp, np_), compute_dtype),
        grid=(kp // tk, np_ // tn),
        in_specs=[
            pl.BlockSpec((tk, tn), lambda i, j: (i, j)),
            pl.BlockSpec((tk, tn), lambda i, j: (i, j)),
        ],
        out_specs=pl.BlockSpec((tk, tn), lambda i, j: (i, j)),
        compiler_params=pltpu.CompilerParams(
            dimension_semantics=("parallel", "parallel"),
            vmem_limit_bytes=_vmem_limit(),
        ),
    )(wt, mt)


# ---------------------------------------------------------------------------
# Hot path kernels:  y = x @ masked_w_t + b   (NN contraction, MXU)
# ---------------------------------------------------------------------------
def _small_fused_kernel(x_ref, w_ref, b_ref, o_ref):
    """Single-block fast path for tiny GRU-D shapes: one dot, fused bias."""
    acc = jnp.dot(x_ref[...].astype(w_ref.dtype), w_ref[...],
                  preferred_element_type=jnp.float32)
    nf = o_ref.shape[1]
    o_ref[...] = (acc[:, :nf] + b_ref[...]).astype(o_ref.dtype)


def _matmul_kernel_accout(x_ref, w_ref, b_ref, o_ref):
    """f32 output: accumulate directly into the resident output block."""
    k = pl.program_id(2)

    @pl.when(k == 0)
    def _init():
        o_ref[...] = jnp.broadcast_to(b_ref[...], o_ref.shape).astype(o_ref.dtype)

    o_ref[...] += lax.dot_general(
        x_ref[...].astype(w_ref.dtype), w_ref[...],
        dimension_numbers=(((1,), (0,)), ((), ())),   # NN: no transpose/relayout
        preferred_element_type=jnp.float32,
    )


def _matmul_kernel_scratch(x_ref, w_ref, b_ref, o_ref, acc_ref):
    """Non-f32 output: f32 VMEM accumulator, cast on the last K step."""
    k = pl.program_id(2)

    @pl.when(k == 0)
    def _init():
        acc_ref[...] = jnp.broadcast_to(b_ref[...], acc_ref.shape)

    acc_ref[...] += lax.dot_general(
        x_ref[...].astype(w_ref.dtype), w_ref[...],
        dimension_numbers=(((1,), (0,)), ((), ())),
        preferred_element_type=jnp.float32,
    )

    @pl.when(k == pl.num_programs(2) - 1)
    def _fin():
        o_ref[...] = acc_ref[...].astype(o_ref.dtype)


def filter_linear_apply(x, folded_weight_t, bias):
    """y = x @ (M*W).T + b, with (M*W).T precomputed by fold_filter_weight."""
    batch, in_features = x.shape
    assert bias is not None and bias.ndim == 1
    out_features = int(bias.shape[0])
    tk, tn, kp, np_ = _plan_kn(in_features, out_features)
    assert folded_weight_t.shape == (kp, np_), (
        "folded_weight_t must come from fold_filter_weight for these dims")
    out_dtype = x.dtype

    # --- tiny GRU-D regime: single fused block, no grid, no padding ---------
    if batch <= 128 and kp == in_features and kp <= 1024 and np_ <= 1024:
        b2 = bias.astype(jnp.float32).reshape(1, out_features)
        return pl.pallas_call(
            _small_fused_kernel,
            out_shape=jax.ShapeDtypeStruct((batch, out_features), out_dtype),
        )(x, folded_weight_t, b2)

    # --- general tiled (M, N, K) path ---------------------------------------
    tm = batch if batch <= 512 else 512
    x_in = x
    if kp != in_features:  # rare: huge K not a multiple of 128 -> zero-pad K only
        x_in = jnp.pad(x, ((0, 0), (0, kp - in_features)))
    b2 = jnp.pad(bias.astype(jnp.float32), (0, np_ - out_features)).reshape(1, np_)

    grid = (pl.cdiv(batch, tm), np_ // tn, kp // tk)
    in_specs = [
        pl.BlockSpec((tm, tk), lambda i, j, k: (i, k)),   # x (f32, cast in-kernel)
        pl.BlockSpec((tk, tn), lambda i, j, k: (k, j)),   # folded weight (K, N)
        pl.BlockSpec((1, tn), lambda i, j, k: (0, j)),    # bias
    ]
    out_specs = pl.BlockSpec((tm, tn), lambda i, j, k: (i, j))
    out_shape = jax.ShapeDtypeStruct((batch, out_features), out_dtype)
    cparams = pltpu.CompilerParams(
        dimension_semantics=("parallel", "parallel", "arbitrary"),
        vmem_limit_bytes=_vmem_limit(),
    )

    if out_dtype == jnp.float32:
        return pl.pallas_call(
            _matmul_kernel_accout, out_shape=out_shape, grid=grid,
            in_specs=in_specs, out_specs=out_specs, compiler_params=cparams,
        )(x_in, folded_weight_t, b2)
    return pl.pallas_call(
        _matmul_kernel_scratch, out_shape=out_shape, grid=grid,
        in_specs=in_specs, out_specs=out_specs,
        scratch_shapes=[pltpu.VMEM((tm, tn), jnp.float32)],
        compiler_params=cparams,
    )(x_in, folded_weight_t, b2)


def filter_linear(x, weight, filter_square_matrix, bias=None, *,
                  compute_dtype=jnp.bfloat16):
    """Full forward matching the PyTorch module.

    NOTE: this folds the mask every call for convenience.  In a training /
    inference loop call fold_filter_weight() once per weight update and
    filter_linear_apply() per step so the mask multiply and the weight
    transpose/pad are not re-done in the hot path.
    """
    out_features = weight.shape[0]
    if bias is None:
        bias = jnp.zeros((out_features,), jnp.float32)
    folded = fold_filter_weight(weight, filter_square_matrix,
                                compute_dtype=compute_dtype)
    return filter_linear_apply(x, folded, bias)


# ---------------------------------------------------------------------------
# Fast path for filter_square_matrix == I (GRU-D decay gates):
#   y = x * diag(W) + b   -- elementwise VPU kernel, no MXU, no N^2 FLOPs.
# ---------------------------------------------------------------------------
def prepare_identity_filter(weight, bias):
    """Once per weight update: diag(W) and bias as (1, n) f32 rows."""
    n = weight.shape[0]
    assert weight.shape == (n, n)
    wd = jnp.diagonal(weight).astype(jnp.float32).reshape(1, n)
    b = jnp.zeros((n,), jnp.float32) if bias is None else bias.astype(jnp.float32)
    return wd, b.reshape(1, n)


def _identity_kernel(x_ref, wd_ref, b_ref, o_ref):
    o_ref[...] = (x_ref[...] * wd_ref[...] + b_ref[...]).astype(o_ref.dtype)


def filter_linear_identity_filter(x, weight, bias):
    batch, n = x.shape
    wd, b2 = prepare_identity_filter(weight, bias)  # cheap; callers may hoist
    out_shape = jax.ShapeDtypeStruct((batch, n), x.dtype)

    if batch <= 512 and n <= 2048:  # single block, no padding, lane-dense store
        return pl.pallas_call(_identity_kernel, out_shape=out_shape)(x, wd, b2)

    tm = 256
    tnb = min(1024, _round_up(n, 128))
    return pl.pallas_call(
        _identity_kernel,
        out_shape=out_shape,
        grid=(pl.cdiv(batch, tm), pl.cdiv(n, tnb)),
        in_specs=[
            pl.BlockSpec((tm, tnb), lambda i, j: (i, j)),
            pl.BlockSpec((1, tnb), lambda i, j: (0, j)),
            pl.BlockSpec((1, tnb), lambda i, j: (0, j)),
        ],
        out_specs=pl.BlockSpec((tm, tnb), lambda i, j: (i, j)),
        compiler_params=pltpu.CompilerParams(
            dimension_semantics=("parallel", "parallel"),
            vmem_limit_bytes=_vmem_limit(),
        ),
    )(x, wd, b2)


if __name__ == "__main__":
    key = jax.random.PRNGKey(0)
    k_x, k_w, k_b, k_x2, k_w2, k_b2, k_m2, _ = jax.random.split(key, 8)

    # --- Case 1: tiny GRU-D shapes, identity filter (decay gate) -------------
    batch, in_features, out_features = 8, 32, 32
    stdv = 1.0 / math.sqrt(in_features)
    weight = jax.random.uniform(k_w, (out_features, in_features),
                                minval=-stdv, maxval=stdv, dtype=jnp.float32)
    bias = jax.random.uniform(k_b, (out_features,),
                              minval=-stdv, maxval=stdv, dtype=jnp.float32)
    x = jax.random.normal(k_x, (batch, in_features), dtype=jnp.float32)

    eye_mask = jnp.eye(out_features, in_features, dtype=jnp.float32)
    y_ref = jnp.dot(x, (eye_mask * weight).T,
                    precision=lax.Precision.HIGHEST) + bias

    # f32 parity path (strict match with the PyTorch module)
    w_fold_f32 = fold_filter_weight(weight, eye_mask, compute_dtype=jnp.float32)
    y_f32 = jax.block_until_ready(filter_linear_apply(x, w_fold_f32, bias))
    assert y_f32.shape == (batch, out_features)
    assert jnp.allclose(y_f32, y_ref, atol=1e-4, rtol=1e-4), "f32 small path mismatch"

    # default bf16 compute path
    w_fold_bf16 = fold_filter_weight(weight, eye_mask)
    y_bf = jax.block_until_ready(filter_linear_apply(x, w_fold_bf16, bias))
    assert jnp.allclose(y_bf, y_ref, atol=2e-2, rtol=2e-2), "bf16 small path mismatch"

    # elementwise identity-filter fast path
    y_diag = jax.block_until_ready(filter_linear_identity_filter(x, weight, bias))
    assert jnp.allclose(y_diag, y_ref, atol=1e-5, rtol=1e-5), "identity fast path mismatch"

    # --- Case 2: arbitrary 0/1 filter, shapes that take the tiled path -------
    b2n, in2, out2 = 160, 256, 192
    stdv2 = 1.0 / math.sqrt(in2)
    w2 = jax.random.uniform(k_w2, (out2, in2), minval=-stdv2, maxval=stdv2,
                            dtype=jnp.float32)
    bi2 = jax.random.uniform(k_b2, (out2,), minval=-stdv2, maxval=stdv2,
                             dtype=jnp.float32)
    x2 = jax.random.normal(k_x2, (b2n, in2), dtype=jnp.float32)
    mask2 = (jax.random.uniform(k_m2, (out2, in2)) > 0.5).astype(jnp.float32)
    y2_ref = jnp.dot(x2, (mask2 * w2).T, precision=lax.Precision.HIGHEST) + bi2

    y2 = jax.block_until_ready(filter_linear(x2, w2, mask2, bi2))  # bf16 fold+apply
    assert y2.shape == (b2n, out2)
    assert jnp.allclose(y2, y2_ref, atol=3e-2, rtol=3e-2), "tiled bf16 path mismatch"

    w2_f32 = fold_filter_weight(w2, mask2, compute_dtype=jnp.float32)
    y2f = jax.block_until_ready(filter_linear_apply(x2, w2_f32, bi2))
    assert jnp.allclose(y2f, y2_ref, atol=1e-4, rtol=1e-4), "tiled f32 path mismatch"

    print("KERNEL_OK")
</pallas_src>

<mosaic_0001>
module attributes {stable_mosaic.version = 11 : i64} {
  func.func @_mask_fold_kernel(%arg0: i32, %arg1: i32, %arg2: memref<32x128xf32, #tpu.memory_space<vmem>>, %arg3: memref<32x128xf32, #tpu.memory_space<vmem>>, %arg4: memref<32x128xf32, #tpu.memory_space<vmem>>) attributes {dimension_semantics = [#tpu.dimension_semantics<parallel>, #tpu.dimension_semantics<parallel>], iteration_bounds = array<i64: 1, 1>, scalar_prefetch = 0 : i64, scratch_operands = 0 : i64, tpu.core_type = #tpu.core_type<tc>, window_params = [{transform_indices = @transform_0, window_bounds = array<i64: 32, 128>}, {transform_indices = @transform_1, window_bounds = array<i64: 32, 128>}, {transform_indices = @transform_2, window_bounds = array<i64: 32, 128>}]} {
    %c0 = arith.constant 0 : index
    %c0_0 = arith.constant 0 : index
    %0 = vector.load %arg2[%c0, %c0_0] : memref<32x128xf32, #tpu.memory_space<vmem>>, vector<32x128xf32>
    %c0_1 = arith.constant 0 : index
    %c0_2 = arith.constant 0 : index
    %1 = vector.load %arg3[%c0_1, %c0_2] : memref<32x128xf32, #tpu.memory_space<vmem>>, vector<32x128xf32>
    %2 = arith.mulf %0, %1 : vector<32x128xf32>
    %c0_3 = arith.constant 0 : index
    %c0_4 = arith.constant 0 : index
    %3 = vector.load %arg4[%c0_3, %c0_4] : memref<32x128xf32, #tpu.memory_space<vmem>>, vector<32x128xf32>
    tpu.vector_store %arg4[%c0_3, %c0_4], %2 {strides = array<i32>} : memref<32x128xf32, #tpu.memory_space<vmem>>, vector<32x128xf32>,
    return
  }
  func.func @transform_0(%arg0: i32, %arg1: i32) -> (i32, i32) {
    %c0_i32 = arith.constant 0 : i32
    return %arg0, %arg1 : i32, i32
  }
  func.func @transform_1(%arg0: i32, %arg1: i32) -> (i32, i32) {
    %c0_i32 = arith.constant 0 : i32
    return %arg0, %arg1 : i32, i32
  }
  func.func @transform_2(%arg0: i32, %arg1: i32) -> (i32, i32) {
    %c0_i32 = arith.constant 0 : i32
    return %arg0, %arg1 : i32, i32
  }
}

</mosaic_0001>

<llo_original>
// kernel: tpu_custom_call.1
$region0: #{tpu_custom_call.1}
  #allocation0 [shape = 'u32[]', space=smem, size = 0x4, offset = 0x4, fixed_abs, tag = 'smem constant byte address 0x4 - core index']
  #allocation1 [shape = 'u32[72,128]{1,0:T(1,128)}', space=vmem, size = 0x9000, scoped, tag = 'internal scratch']
  %s0 = inlined_call_operand.hbm [shape: f32[32,128], index: 0, kind: input, shape index: {}]
  %s1 = inlined_call_operand.hbm [shape: f32[32,128], index: 1, kind: input, shape index: {}]
  %s2 = inlined_call_operand.hbm [shape: f32[32,128], index: 2, kind: output, shape index: {}]
  %s3 = sld [smem:[#allocation0]]
  $region26: #{tpu_custom_call.1} parent=0
    _
  %s5 = ssub.s32 1, %s3
  %s6 = scalar_select 0, %s5, %s3
  $region1: #{tpu_custom_call.1} parent=0
    #allocation2 [shape = 'u8[16384]{0}', space=vmem, size = 0x4000, scoped, tag = 'input window, operand 0, single buffered']
    #allocation3 [shape = 's32[1]{0}', space=sflag, size = 0x4, scoped, tag = 'scoped memory for tpu_custom_call.1']
    #allocation4 [shape = 's32[1]{0}', space=sflag, size = 0x4, scoped, tag = 'scoped memory for tpu_custom_call.1']
    #allocation5 [shape = 'u8[16384]{0}', space=vmem, size = 0x4000, scoped, tag = 'input window, operand 1, single buffered']
    #allocation6 [shape = 's32[1]{0}', space=sflag, size = 0x4, scoped, tag = 'scoped memory for tpu_custom_call.1']
    #allocation7 [shape = 'u8[16384]{0}', space=vmem, size = 0x4000, scoped, tag = 'output window, operand 0, single buffered']
    %7 = vsyncpa [#allocation3], 0
    %8 = vsyncpa [#allocation6], 0
    %9 = vsyncpa [#allocation4], 0
    // Predicated region
    $region2: #{tpu_custom_call.1} parent=1 // pred_check
      _
    $region3: #{tpu_custom_call.1} parent=1 // pred_check_branch
      %11 = sbr.rel (0) target = $region5
    $region4: #{tpu_custom_call.1} parent=1 // pred_region
      %13 = vsyncadd [#allocation3], 0
      %s14 = sshll.u32 %s0, 4
      %s15 = int_to_ptr.hbm [resolvable:$true] %s14
      %s16 = sshll.u32 [#allocation2], 4
      %s17 = int_to_ptr.vmem [resolvable:$true] %s16
      %22 = dma.hbm_to_vmem [thread:$0]  %s15, 512, %s17, [#allocation3], 128, 128, 8
    $region5: #{tpu_custom_call.1} parent=1 // pred_fallthru
      _
    // Predicated region
    $region6: #{tpu_custom_call.1} parent=1 // pred_check
      _
    $region7: #{tpu_custom_call.1} parent=1 // pred_check_branch
      %24 = sbr.rel (0) target = $region9
    $region8: #{tpu_custom_call.1} parent=1 // pred_region
      %26 = vsyncadd [#allocation6], 0
      %s27 = sshll.u32 %s1, 4
      %s28 = int_to_ptr.hbm [resolvable:$true] %s27
      %s29 = sshll.u32 [#allocation5], 4
      %s30 = int_to_ptr.vmem [resolvable:$true] %s29
      %35 = dma.hbm_to_vmem [thread:$0]  %s28, 512, %s30, [#allocation6], 128, 128, 8
    $region9: #{tpu_custom_call.1} parent=1 // pred_fallthru
      _
    // Predicated region
    $region10: #{tpu_custom_call.1} parent=1 // pred_check
      _
    $region11: #{tpu_custom_call.1} parent=1 // pred_check_branch
      %37 = sbr.rel (0) target = $region13
    $region12: #{tpu_custom_call.1} parent=1 // pred_region
      %39 = dma.done [#allocation3], 512
    $region13: #{tpu_custom_call.1} parent=1 // pred_fallthru
      _
    // Predicated region
    $region14: #{tpu_custom_call.1} parent=1 // pred_check
      _
    $region15: #{tpu_custom_call.1} parent=1 // pred_check_branch
      %41 = sbr.rel (0) target = $region17
    $region16: #{tpu_custom_call.1} parent=1 // pred_region
      %43 = dma.done [#allocation6], 512
    $region17: #{tpu_custom_call.1} parent=1 // pred_fallthru
      _
    %v44 = vld [vmem:[#allocation2] sm:$0xff]
    %v45 = vld [vmem:[#allocation2 + $0x8] sm:$0xff]
    %v46 = vld [vmem:[#allocation2 + $0x10] sm:$0xff]
    %v47 = vld [vmem:[#allocation2 + $0x18] sm:$0xff]
    %v48 = vld [vmem:[#allocation5] sm:$0xff]
    %v49 = vld [vmem:[#allocation5 + $0x8] sm:$0xff]
    %v50 = vld [vmem:[#allocation5 + $0x10] sm:$0xff]
    %v51 = vld [vmem:[#allocation5 + $0x18] sm:$0xff]
    %v52 = vmul.f32 %v44, %v48
    %v53 = vmul.f32 %v45, %v49
    %v54 = vmul.f32 %v46, %v50
    %v55 = vmul.f32 %v47, %v51
    %56 = vst [vmem:[#allocation7] sm:$0xff] %v52
    %57 = vst [vmem:[#allocation7 + $0x8] sm:$0xff] %v53
    %58 = vst [vmem:[#allocation7 + $0x10] sm:$0xff] %v54
    %59 = vst [vmem:[#allocation7 + $0x18] sm:$0xff] %v55
    // Predicated region
    $region18: #{tpu_custom_call.1} parent=1 // pred_check
      _
    $region19: #{tpu_custom_call.1} parent=1 // pred_check_branch
      %61 = sbr.rel (0) target = $region21
    $region20: #{tpu_custom_call.1} parent=1 // pred_region
      %63 = vsyncadd [#allocation4], 0
      %s64 = sshll.u32 [#allocation7], 4
      %s65 = int_to_ptr.vmem [resolvable:$true] %s64
      %s66 = sshll.u32 %s2, 4
      %s67 = int_to_ptr.hbm [resolvable:$true] %s66
      %72 = dma.vmem_to_hbm [thread:$0]  %s65, 512, %s67, [#allocation4], 128, 128, 8
    $region21: #{tpu_custom_call.1} parent=1 // pred_fallthru
      _
    // Predicated region
    $region22: #{tpu_custom_call.1} parent=1 // pred_check
      _
    $region23: #{tpu_custom_call.1} parent=1 // pred_check_branch
      %74 = sbr.rel (0) target = $region25
    $region24: #{tpu_custom_call.1} parent=1 // pred_region
      %76 = dma.done [#allocation4], 512
    $region25: #{tpu_custom_call.1} parent=1 // pred_fallthru
      _
    %77 = vsyncpa [#allocation3], 1
    %78 = vsyncpa [#allocation6], 1
    %79 = vsyncpa [#allocation4], 1

</llo_original>
